<compile_context>
chip_gen: v7x
topology: tpu7x:2x2x1
jax: 0.10.0
libtpu: 0.0.40
codegen_flags: <defaults>
</compile_context>

<pallas_src>
import jax
import jax.numpy as jnp
from jax.experimental import pallas as pl
from jax.experimental.pallas import tpu as pltpu


# ----------------------------------------------------------------------------
# Frame-level tier kernel: input_expand (Conv1d k=1)  ->  GRU  ->
#                          LearnedUpsampling1d (ConvTranspose1d stride=k=fs + bias)
# ----------------------------------------------------------------------------
def make_frame_rnn_kernel(B, T, dim, has_cond):
    def body(x_ref, cond_ref, w_in_ref, b_in_ref, w_ih_ref, b_ih_ref,
             w_hh_ref, b_hh_ref, h0_ref, w_up_ref, b_up_ref, out_ref):
        # ---- hoisted input projection (Conv1d k=1) + upper conditioning ----
        inp = (jnp.dot(x_ref[...], w_in_ref[...],
                       preferred_element_type=jnp.float32) + b_in_ref[...])
        if has_cond:
            inp = inp + cond_ref[...]
        # ---- hoisted input-side GRU gate projections, all timesteps --------
        gx = (jnp.dot(inp, w_ih_ref[...],
                      preferred_element_type=jnp.float32) + b_ih_ref[...])
        w_hh = w_hh_ref[...]
        b_hh = jnp.broadcast_to(b_hh_ref[...], (B, w_hh.shape[1]))  # hoisted
        h = jnp.broadcast_to(h0_ref[...], (B, dim))
        hs = []
        for t in range(T):                        # sequential recurrence (T<=8)
            gxt = gx[t * B:(t + 1) * B, :]
            gh = jnp.dot(h, w_hh, preferred_element_type=jnp.float32) + b_hh
            s = gxt + gh
            # torch.nn.GRU gate order (r, z, n)
            r = jax.nn.sigmoid(s[:, 0:dim])
            z = jax.nn.sigmoid(s[:, dim:2 * dim])
            n = jnp.tanh(gxt[:, 2 * dim:3 * dim] + r * gh[:, 2 * dim:3 * dim])
            h = (1.0 - z) * n + z * h
            hs.append(h)
        # ---- hoisted LearnedUpsampling: one (T*B,dim)@(dim,fs*dim) matmul ---
        H = jnp.concatenate(hs, axis=0)                        # (T*B, dim)
        up = (jnp.dot(H, w_up_ref[...],
                      preferred_element_type=jnp.float32) + b_up_ref[...])
        out_ref[...] = up                                      # (T*B, fs*dim)

    if has_cond:
        return body

    def body_nocond(x_ref, w_in_ref, b_in_ref, w_ih_ref, b_ih_ref,
                    w_hh_ref, b_hh_ref, h0_ref, w_up_ref, b_up_ref, out_ref):
        return body(x_ref, None, w_in_ref, b_in_ref, w_ih_ref, b_ih_ref,
                    w_hh_ref, b_hh_ref, h0_ref, w_up_ref, b_up_ref, out_ref)
    return body_nocond


def frame_rnn_apply(prev, cond, p):
    """prev: (B, T, n_frame_samples); cond: (B, T, dim) or None (top tier)."""
    B, T, nfs = prev.shape
    dim = p["w_in"].shape[1]
    fs = p["frame_size"]
    x_tm = prev.transpose(1, 0, 2).reshape(T * B, nfs)          # time-major rows
    args = [x_tm]
    if cond is not None:
        args.append(cond.transpose(1, 0, 2).reshape(T * B, dim))
    args += [p["w_in"], p["b_in"], p["w_ih"], p["b_ih"],
             p["w_hh"], p["b_hh"], p["h0"], p["w_up"], p["b_up"]]
    vmem = pl.BlockSpec(memory_space=pltpu.MemorySpace.VMEM)
    up = pl.pallas_call(
        make_frame_rnn_kernel(B, T, dim, cond is not None),
        out_shape=jax.ShapeDtypeStruct((T * B, fs * dim), jnp.float32),
        in_specs=[vmem] * len(args),
        out_specs=vmem,
    )(*args)
    # (T*B, fs*dim) time-major -> (B, T*fs, dim); output pos t*fs+k = tap k of step t
    return up.reshape(T, B, fs, dim).transpose(1, 0, 2, 3).reshape(B, T * fs, dim)


# ----------------------------------------------------------------------------
# SampleLevelMLP kernel: (embedding fused into conv taps, single MXU matmul)
# -> + cond -> relu -> Conv1d(1x1) -> relu -> Conv1d(1x1) -> log_softmax.
# Gridded over row blocks of the flattened (B*L) dimension.
# ----------------------------------------------------------------------------
def make_sample_mlp_kernel(RB, FS, Q, dim):
    def kernel(idx_ref, cond_ref, ec_ref, w_h_ref, b_h_ref, w_o_ref, b_o_ref,
               out_ref):
        lanes = jax.lax.broadcasted_iota(jnp.int32, (RB, Q), 1)
        # Per-tap one-hots built in-register, concatenated at 128-lane-aligned
        # offsets -> one (RB, FS*Q) x (FS*Q, dim) MXU matmul for the fused
        # embedding + Conv1d(k=FS) stage.
        ohs = [(lanes == idx_ref[:, k:k + 1]).astype(jnp.float32)
               for k in range(FS)]
        oh = jnp.concatenate(ohs, axis=1)                              # (RB, FS*Q)
        acc = jnp.dot(oh, ec_ref[...], preferred_element_type=jnp.float32)
        x = jnp.maximum(acc + cond_ref[...], 0.0)                      # relu(input + cond)
        x = jnp.maximum(jnp.dot(x, w_h_ref[...],
                                preferred_element_type=jnp.float32) + b_h_ref[...], 0.0)
        logits = (jnp.dot(x, w_o_ref[...],
                          preferred_element_type=jnp.float32) + b_o_ref[...])
        m = jnp.max(logits, axis=-1, keepdims=True)
        lse = jnp.log(jnp.sum(jnp.exp(logits - m), axis=-1, keepdims=True))
        out_ref[...] = logits - m - lse                                # log_softmax
    return kernel


def _pick_row_block(rows):
    for rb in (512, 256, 128, 64, 32, 16, 8):
        if rb < rows and rows % rb == 0:
            return rb
    return rows


def sample_mlp_apply(idx, cond, p):
    """idx: (B*L, FS) int32 unfolded samples; cond: (B*L, dim)."""
    BL, FS = idx.shape
    dim = cond.shape[-1]
    Q = p["w_o"].shape[1]
    RB = _pick_row_block(BL)
    return pl.pallas_call(
        make_sample_mlp_kernel(RB, FS, Q, dim),
        out_shape=jax.ShapeDtypeStruct((BL, Q), jnp.float32),
        grid=(BL // RB,),
        in_specs=[
            pl.BlockSpec((RB, FS), lambda i: (i, 0)),           # int32 indices
            pl.BlockSpec((RB, dim), lambda i: (i, 0)),          # conditioning
            pl.BlockSpec((FS * Q, dim), lambda i: (0, 0)),      # fused emb @ conv taps
            pl.BlockSpec((dim, dim), lambda i: (0, 0)),
            pl.BlockSpec((1, dim), lambda i: (0, 0)),
            pl.BlockSpec((dim, Q), lambda i: (0, 0)),
            pl.BlockSpec((1, Q), lambda i: (0, 0)),
        ],
        out_specs=pl.BlockSpec((RB, Q), lambda i: (i, 0)),
        compiler_params=pltpu.CompilerParams(dimension_semantics=("parallel",)),
    )(idx, cond, p["emb_conv"], p["w_h"], p["b_h"], p["w_o"], p["b_o"])


# ----------------------------------------------------------------------------
# Predictor.forward glue (slicing / dequantize / reshape / index unfold)
# ----------------------------------------------------------------------------
def linear_dequantize(x, q_levels):
    return x.astype(jnp.float32) / (q_levels / 2.0) - 1.0


def predictor_forward(params, input_sequences):
    B, L = input_sequences.shape
    q_levels = params["q_levels"]
    lookback = params["lookback"]
    dim = params["dim"]

    upper = None
    for p in reversed(params["tiers"]):                 # reversed(frame_level_rnns)
        nfs = p["n_frame_samples"]
        from_i = lookback - nfs
        to_i = L - nfs + 1                              # == input[:, from : -nfs+1]
        prev = 2.0 * linear_dequantize(input_sequences[:, from_i:to_i], q_levels)
        T = prev.shape[1] // nfs
        prev = prev.reshape(B, T, nfs)
        cond = None if upper is None else upper         # top tier: no conditioning add
        upper = frame_rnn_apply(prev, cond, p)

    fs0 = params["tiers"][0]["frame_size"]
    mlp_in = input_sequences[:, lookback - fs0:]
    L_out = mlp_in.shape[1] - fs0 + 1
    # unfold conv taps as int32 indices (no f32 one-hot materialized in HBM)
    idx = jnp.stack([mlp_in[:, k:k + L_out] for k in range(fs0)], axis=-1)  # (B, L_out, FS)
    idx = idx.reshape(B * L_out, fs0).astype(jnp.int32)
    cond = upper.reshape(B * L_out, dim)
    out = sample_mlp_apply(idx, cond, params["mlp"])
    return out.reshape(B, L_out, q_levels)


# ----------------------------------------------------------------------------
# Deterministic parameter init (shapes follow SampleRNN's __init__; GRU gate
# weights stored concatenated (r|z|n) and lane-padded, upsampling taps and the
# embedding->conv fusion precomputed at parameter time).
# ----------------------------------------------------------------------------
def init_params(key, frame_sizes=(4, 4), dim=32, q_levels=256):
    n_frame_samples, acc = [], 1
    for f in frame_sizes:
        acc *= f
        n_frame_samples.append(acc)

    def nrm(k, shape, scale):
        return jax.random.normal(k, shape, jnp.float32) * scale

    def pad_lanes(w, width):
        return jnp.pad(w, ((0, 0), (0, width - w.shape[1])))

    g = 3 * dim
    g_pad = ((g + 127) // 128) * 128                      # 96 -> 128 lanes

    keys = iter(jax.random.split(key, 8 * len(frame_sizes) + 8))
    tiers = []
    for fs, nfs in zip(frame_sizes, n_frame_samples):
        w_ih = nrm(next(keys), (dim, g), (1.0 / dim) ** 0.5)        # GRU weight_ih (r|z|n)
        w_hh = nrm(next(keys), (dim, g), (1.0 / dim) ** 0.5)        # GRU weight_hh (r|z|n)
        w_up = nrm(next(keys), (fs, dim, dim), (1.0 / dim) ** 0.5)  # ConvTranspose1d taps
        b_up = nrm(next(keys), (fs, dim), 0.1)                      # learned upsampling bias
        tiers.append(dict(
            frame_size=fs, n_frame_samples=nfs,
            w_in=nrm(next(keys), (nfs, dim), (1.0 / nfs) ** 0.5),   # Conv1d(nfs->dim, k=1)
            b_in=jnp.zeros((1, dim), jnp.float32),
            w_ih=pad_lanes(w_ih, g_pad),
            b_ih=jnp.zeros((1, g_pad), jnp.float32),
            w_hh=pad_lanes(w_hh, g_pad),
            b_hh=jnp.zeros((1, g_pad), jnp.float32),
            h0=nrm(next(keys), (1, dim), 0.1),                      # n_rnn=1
            w_up=jnp.concatenate([w_up[k] for k in range(fs)], axis=1),   # (dim, fs*dim)
            b_up=b_up.reshape(1, fs * dim),
        ))
    fs0 = frame_sizes[0]
    emb = nrm(next(keys), (q_levels, q_levels), (1.0 / q_levels) ** 0.5)
    w_c = nrm(next(keys), (fs0, q_levels, dim),
              (1.0 / (q_levels * fs0)) ** 0.5)                      # Conv1d(Q->dim, k=fs0)
    # fused embedding @ conv taps, flattened to (FS*Q, dim) so the MLP kernel
    # runs ONE lane-dense MXU matmul over the concatenated per-tap one-hots.
    emb_conv = jnp.einsum("qe,ked->kqd", emb, w_c).reshape(fs0 * q_levels, dim)
    mlp = dict(
        emb_conv=emb_conv,                                          # (FS*Q, dim)
        w_h=nrm(next(keys), (dim, dim), (1.0 / dim) ** 0.5),
        b_h=jnp.zeros((1, dim), jnp.float32),
        w_o=nrm(next(keys), (dim, q_levels), (1.0 / dim) ** 0.5),
        b_o=jnp.zeros((1, q_levels), jnp.float32),
    )
    return dict(tiers=tiers, mlp=mlp, q_levels=q_levels, dim=dim,
                lookback=n_frame_samples[-1])


if __name__ == "__main__":
    key = jax.random.PRNGKey(0)
    frame_sizes = (4, 4)
    dim = 32
    q_levels = 256
    batch = 2
    seq_len = 32                                   # must be divisible by lookback

    pkey, dkey = jax.random.split(key)
    params = init_params(pkey, frame_sizes, dim, q_levels)
    lookback = params["lookback"]                  # 16
    L = lookback + seq_len - 1                     # length produced by samplernn DataLoader

    input_sequences = jax.random.randint(dkey, (batch, L), 0, q_levels, dtype=jnp.int32)

    out = predictor_forward(params, input_sequences)
    out = jax.block_until_ready(out)

    assert out.shape == (batch, seq_len, q_levels), out.shape
    assert bool(jnp.all(jnp.isfinite(out)))
    # log_softmax rows must exponentiate-sum to 1
    assert bool(jnp.allclose(jnp.exp(out).sum(-1), 1.0, atol=1e-3))
    print("KERNEL_OK")
</pallas_src>

<mosaic_0001>
module attributes {stable_mosaic.version = 11 : i64} {
  func.func @body_nocond(%arg0: memref<4x16xf32, #tpu.memory_space<vmem>>, %arg1: memref<16x32xf32, #tpu.memory_space<vmem>>, %arg2: memref<1x32xf32, #tpu.memory_space<vmem>>, %arg3: memref<32x128xf32, #tpu.memory_space<vmem>>, %arg4: memref<1x128xf32, #tpu.memory_space<vmem>>, %arg5: memref<32x128xf32, #tpu.memory_space<vmem>>, %arg6: memref<1x128xf32, #tpu.memory_space<vmem>>, %arg7: memref<1x32xf32, #tpu.memory_space<vmem>>, %arg8: memref<32x128xf32, #tpu.memory_space<vmem>>, %arg9: memref<1x128xf32, #tpu.memory_space<vmem>>, %arg10: memref<4x128xf32, #tpu.memory_space<vmem>>) attributes {dimension_semantics = [], scalar_prefetch = 0 : i64, scratch_operands = 0 : i64, tpu.core_type = #tpu.core_type<tc>} {
    %c0 = arith.constant 0 : index
    %c0_0 = arith.constant 0 : index
    %0 = vector.load %arg0[%c0, %c0_0] : memref<4x16xf32, #tpu.memory_space<vmem>>, vector<4x16xf32>
    %c0_1 = arith.constant 0 : index
    %c0_2 = arith.constant 0 : index
    %1 = vector.load %arg1[%c0_1, %c0_2] : memref<16x32xf32, #tpu.memory_space<vmem>>, vector<16x32xf32>
    %cst = arith.constant dense<0.000000e+00> : vector<4x32xf32>
    %2 = tpu.matmul %0, %1, %cst {dimension_numbers = #tpu.dot_dimension_numbers<[1], [0], [0], [1], [0, 0, 1, 1], [], []>} : vector<4x16xf32>, vector<16x32xf32>, vector<4x32xf32> -> vector<4x32xf32>
    %c0_3 = arith.constant 0 : index
    %c0_4 = arith.constant 0 : index
    %3 = vector.load %arg2[%c0_3, %c0_4] : memref<1x32xf32, #tpu.memory_space<vmem>>, vector<1x32xf32>
    %4 = vector.broadcast %3 : vector<1x32xf32> to vector<4x32xf32>
    %5 = arith.addf %2, %4 : vector<4x32xf32>
    %c0_5 = arith.constant 0 : index
    %c0_6 = arith.constant 0 : index
    %6 = vector.load %arg3[%c0_5, %c0_6] : memref<32x128xf32, #tpu.memory_space<vmem>>, vector<32x128xf32>
    %cst_7 = arith.constant dense<0.000000e+00> : vector<4x128xf32>
    %7 = tpu.matmul %5, %6, %cst_7 {dimension_numbers = #tpu.dot_dimension_numbers<[1], [0], [0], [1], [0, 0, 1, 1], [], []>} : vector<4x32xf32>, vector<32x128xf32>, vector<4x128xf32> -> vector<4x128xf32>
    %c0_8 = arith.constant 0 : index
    %c0_9 = arith.constant 0 : index
    %8 = vector.load %arg4[%c0_8, %c0_9] : memref<1x128xf32, #tpu.memory_space<vmem>>, vector<1x128xf32>
    %9 = vector.broadcast %8 : vector<1x128xf32> to vector<4x128xf32>
    %10 = arith.addf %7, %9 : vector<4x128xf32>
    %c0_10 = arith.constant 0 : index
    %c0_11 = arith.constant 0 : index
    %11 = vector.load %arg5[%c0_10, %c0_11] : memref<32x128xf32, #tpu.memory_space<vmem>>, vector<32x128xf32>
    %c0_12 = arith.constant 0 : index
    %c0_13 = arith.constant 0 : index
    %12 = vector.load %arg6[%c0_12, %c0_13] : memref<1x128xf32, #tpu.memory_space<vmem>>, vector<1x128xf32>
    %13 = vector.shape_cast %12 : vector<1x128xf32> to vector<1x128xf32>
    %14 = vector.broadcast %13 : vector<1x128xf32> to vector<2x128xf32>
    %c0_14 = arith.constant 0 : index
    %c0_15 = arith.constant 0 : index
    %15 = vector.load %arg7[%c0_14, %c0_15] : memref<1x32xf32, #tpu.memory_space<vmem>>, vector<1x32xf32>
    %16 = vector.shape_cast %15 : vector<1x32xf32> to vector<1x32xf32>
    %17 = vector.broadcast %16 : vector<1x32xf32> to vector<2x32xf32>
    %18 = vector.extract_strided_slice %10 {offsets = [0, 0], sizes = [2, 128], strides = [1, 1]} : vector<4x128xf32> to vector<2x128xf32>
    %cst_16 = arith.constant dense<0.000000e+00> : vector<2x128xf32>
    %19 = tpu.matmul %17, %11, %cst_16 {dimension_numbers = #tpu.dot_dimension_numbers<[1], [0], [0], [1], [0, 0, 1, 1], [], []>} : vector<2x32xf32>, vector<32x128xf32>, vector<2x128xf32> -> vector<2x128xf32>
    %20 = arith.addf %19, %14 : vector<2x128xf32>
    %21 = arith.addf %18, %20 : vector<2x128xf32>
    %22 = vector.extract_strided_slice %21 {offsets = [0, 0], sizes = [2, 32], strides = [1, 1]} : vector<2x128xf32> to vector<2x32xf32>
    %23 = arith.negf %22 : vector<2x32xf32>
    %24 = math.exp %23 : vector<2x32xf32>
    %cst_17 = arith.constant 1.000000e+00 : f32
    %25 = vector.broadcast %cst_17 : f32 to vector<2x32xf32>
    %26 = arith.addf %25, %24 : vector<2x32xf32>
    %27 = arith.divf %25, %26 : vector<2x32xf32>
    %28 = vector.extract_strided_slice %21 {offsets = [0, 32], sizes = [2, 32], strides = [1, 1]} : vector<2x128xf32> to vector<2x32xf32>
    %29 = arith.negf %28 : vector<2x32xf32>
    %30 = math.exp %29 : vector<2x32xf32>
    %cst_18 = arith.constant 1.000000e+00 : f32
    %31 = vector.broadcast %cst_18 : f32 to vector<2x32xf32>
    %32 = arith.addf %31, %30 : vector<2x32xf32>
    %33 = arith.divf %31, %32 : vector<2x32xf32>
    %34 = vector.extract_strided_slice %18 {offsets = [0, 64], sizes = [2, 32], strides = [1, 1]} : vector<2x128xf32> to vector<2x32xf32>
    %35 = vector.extract_strided_slice %20 {offsets = [0, 64], sizes = [2, 32], strides = [1, 1]} : vector<2x128xf32> to vector<2x32xf32>
    %36 = arith.mulf %27, %35 : vector<2x32xf32>
    %37 = arith.addf %34, %36 : vector<2x32xf32>
    %38 = math.tanh %37 : vector<2x32xf32>
    %cst_19 = arith.constant 1.000000e+00 : f32
    %39 = vector.broadcast %cst_19 : f32 to vector<2x32xf32>
    %40 = arith.subf %39, %33 : vector<2x32xf32>
    %41 = arith.mulf %40, %38 : vector<2x32xf32>
    %42 = arith.mulf %33, %17 : vector<2x32xf32>
    %43 = arith.addf %41, %42 : vector<2x32xf32>
    %44 = vector.extract_strided_slice %10 {offsets = [2, 0], sizes = [2, 128], strides = [1, 1]} : vector<4x128xf32> to vector<2x128xf32>
    %cst_20 = arith.constant dense<0.000000e+00> : vector<2x128xf32>
    %45 = tpu.matmul %43, %11, %cst_20 {dimension_numbers = #tpu.dot_dimension_numbers<[1], [0], [0], [1], [0, 0, 1, 1], [], []>} : vector<2x32xf32>, vector<32x128xf32>, vector<2x128xf32> -> vector<2x128xf32>
    %46 = arith.addf %45, %14 : vector<2x128xf32>
    %47 = arith.addf %44, %46 : vector<2x128xf32>
    %48 = vector.extract_strided_slice %47 {offsets = [0, 0], sizes = [2, 32], strides = [1, 1]} : vector<2x128xf32> to vector<2x32xf32>
    %49 = arith.negf %48 : vector<2x32xf32>
    %50 = math.exp %49 : vector<2x32xf32>
    %cst_21 = arith.constant 1.000000e+00 : f32
    %51 = vector.broadcast %cst_21 : f32 to vector<2x32xf32>
    %52 = arith.addf %51, %50 : vector<2x32xf32>
    %53 = arith.divf %51, %52 : vector<2x32xf32>
    %54 = vector.extract_strided_slice %47 {offsets = [0, 32], sizes = [2, 32], strides = [1, 1]} : vector<2x128xf32> to vector<2x32xf32>
    %55 = arith.negf %54 : vector<2x32xf32>
    %56 = math.exp %55 : vector<2x32xf32>
    %cst_22 = arith.constant 1.000000e+00 : f32
    %57 = vector.broadcast %cst_22 : f32 to vector<2x32xf32>
    %58 = arith.addf %57, %56 : vector<2x32xf32>
    %59 = arith.divf %57, %58 : vector<2x32xf32>
    %60 = vector.extract_strided_slice %44 {offsets = [0, 64], sizes = [2, 32], strides = [1, 1]} : vector<2x128xf32> to vector<2x32xf32>
    %61 = vector.extract_strided_slice %46 {offsets = [0, 64], sizes = [2, 32], strides = [1, 1]} : vector<2x128xf32> to vector<2x32xf32>
    %62 = arith.mulf %53, %61 : vector<2x32xf32>
    %63 = arith.addf %60, %62 : vector<2x32xf32>
    %64 = math.tanh %63 : vector<2x32xf32>
    %cst_23 = arith.constant 1.000000e+00 : f32
    %65 = vector.broadcast %cst_23 : f32 to vector<2x32xf32>
    %66 = arith.subf %65, %59 : vector<2x32xf32>
    %67 = arith.mulf %66, %64 : vector<2x32xf32>
    %68 = arith.mulf %59, %43 : vector<2x32xf32>
    %69 = arith.addf %67, %68 : vector<2x32xf32>
    %70 = tpu.concatenate %43, %69 in 0 : vector<2x32xf32>, vector<2x32xf32> -> vector<4x32xf32>
    %c0_24 = arith.constant 0 : index
    %c0_25 = arith.constant 0 : index
    %71 = vector.load %arg8[%c0_24, %c0_25] : memref<32x128xf32, #tpu.memory_space<vmem>>, vector<32x128xf32>
    %cst_26 = arith.constant dense<0.000000e+00> : vector<4x128xf32>
    %72 = tpu.matmul %70, %71, %cst_26 {dimension_numbers = #tpu.dot_dimension_numbers<[1], [0], [0], [1], [0, 0, 1, 1], [], []>} : vector<4x32xf32>, vector<32x128xf32>, vector<4x128xf32> -> vector<4x128xf32>
    %c0_27 = arith.constant 0 : index
    %c0_28 = arith.constant 0 : index
    %73 = vector.load %arg9[%c0_27, %c0_28] : memref<1x128xf32, #tpu.memory_space<vmem>>, vector<1x128xf32>
    %74 = vector.broadcast %73 : vector<1x128xf32> to vector<4x128xf32>
    %75 = arith.addf %72, %74 : vector<4x128xf32>
    %c0_29 = arith.constant 0 : index
    %c0_30 = arith.constant 0 : index
    %76 = vector.load %arg10[%c0_29, %c0_30] : memref<4x128xf32, #tpu.memory_space<vmem>>, vector<4x128xf32>
    tpu.vector_store %arg10[%c0_29, %c0_30], %75 {strides = array<i32>} : memref<4x128xf32, #tpu.memory_space<vmem>>, vector<4x128xf32>,
    return
  }
}

</mosaic_0001>

<llo_original>
// kernel: tpu_custom_call.1
$region0: #{tpu_custom_call.1}
  #allocation0 [shape = 'u32[]', space=smem, size = 0x4, offset = 0x4, fixed_abs, tag = 'smem constant byte address 0x4 - core index']
  #allocation1 [shape = 'u32[144,128]{1,0:T(1,128)}', space=vmem, size = 0x12000, scoped, tag = 'internal scratch']
  %s0 = inlined_call_operand.hbm [shape: f32[4,16], index: 0, kind: input, shape index: {}]
  %s1 = inlined_call_operand.hbm [shape: f32[16,32], index: 1, kind: input, shape index: {}]
  %s2 = inlined_call_operand.vmem [shape: f32[1,32], index: 2, kind: input, shape index: {}]
  %s3 = inlined_call_operand.hbm [shape: f32[32,128], index: 3, kind: input, shape index: {}]
  %s4 = inlined_call_operand.vmem [shape: f32[1,128], index: 4, kind: input, shape index: {}]
  %s5 = inlined_call_operand.hbm [shape: f32[32,128], index: 5, kind: input, shape index: {}]
  %s6 = inlined_call_operand.vmem [shape: f32[1,128], index: 6, kind: input, shape index: {}]
  %s7 = inlined_call_operand.vmem [shape: f32[1,32], index: 7, kind: input, shape index: {}]
  %s8 = inlined_call_operand.hbm [shape: f32[32,128], index: 8, kind: input, shape index: {}]
  %s9 = inlined_call_operand.vmem [shape: f32[1,128], index: 9, kind: input, shape index: {}]
  %s10 = inlined_call_operand.hbm [shape: f32[4,128], index: 10, kind: output, shape index: {}]
  %s11 = sld [smem:[#allocation0]]
  $region70: #{tpu_custom_call.1} parent=0
    _
  %s13 = ssub.s32 1, %s11
  %s14 = scalar_select 0, %s13, %s11
  $region1: #{tpu_custom_call.1} parent=0
    #allocation2 [shape = 'u8[2048]{0}', space=vmem, size = 0x800, scoped, tag = 'input window, operand 0, single buffered']
    #allocation3 [shape = 's32[1]{0}', space=sflag, size = 0x4, scoped, tag = 'scoped memory for tpu_custom_call.1']
    #allocation4 [shape = 's32[1]{0}', space=sflag, size = 0x4, scoped, tag = 'scoped memory for tpu_custom_call.1']
    #allocation5 [shape = 'u8[8192]{0}', space=vmem, size = 0x2000, scoped, tag = 'input window, operand 1, single buffered']
    #allocation6 [shape = 's32[1]{0}', space=sflag, size = 0x4, scoped, tag = 'scoped memory for tpu_custom_call.1']
    #allocation7 [shape = 'u8[16384]{0}', space=vmem, size = 0x4000, scoped, tag = 'input window, operand 3, single buffered']
    #allocation8 [shape = 'u8[16384]{0}', space=vmem, size = 0x4000, scoped, tag = 'input window, operand 5, single buffered']
    #allocation9 [shape = 's32[1]{0}', space=sflag, size = 0x4, scoped, tag = 'scoped memory for tpu_custom_call.1']
    #allocation10 [shape = 'u8[16384]{0}', space=vmem, size = 0x4000, scoped, tag = 'input window, operand 8, single buffered']
    #allocation11 [shape = 'u8[2048]{0}', space=vmem, size = 0x800, scoped, tag = 'output window, operand 0, single buffered']
    %15 = vsyncpa [#allocation3], 0
    %16 = vsyncpa [#allocation6], 0
    %17 = vsyncpa [#allocation9], 0
    %18 = vsyncpa [#allocation4], 0
    // Predicated region
    $region2: #{tpu_custom_call.1} parent=1 // pred_check
      _
    $region3: #{tpu_custom_call.1} parent=1 // pred_check_branch
      %20 = sbr.rel (0) target = $region5
    $region4: #{tpu_custom_call.1} parent=1 // pred_region
      %s22 = ssub.s32 64, 64
      %23 = vsyncadd [#allocation3], %s22
      %s25 = sshll.u32 [#allocation2], 4
      %s26 = int_to_ptr.vmem [resolvable:$true] %s25
      %28 = dma.hbm_to_vmem [thread:$0]  %s0, 64, %s26, [#allocation3]
    $region5: #{tpu_custom_call.1} parent=1 // pred_fallthru
      _
    // Predicated region
    $region6: #{tpu_custom_call.1} parent=1 // pred_check
      _
    $region7: #{tpu_custom_call.1} parent=1 // pred_check_branch
      %30 = sbr.rel (0) target = $region9
    $region8: #{tpu_custom_call.1} parent=1 // pred_region
      %s32 = ssub.s32 256, 256
      %33 = vsyncadd [#allocation6], %s32
      %s34 = sshll.u32 [#allocation5], 4
      %s35 = int_to_ptr.vmem [resolvable:$true] %s34
      %40 = dma.hbm_to_vmem [thread:$0]  %s1, 256, %s35, [#allocation6], 128, 128, 8
    $region9: #{tpu_custom_call.1} parent=1 // pred_fallthru
      _
    // Predicated region
    $region10: #{tpu_custom_call.1} parent=1 // pred_check
      _
    $region11: #{tpu_custom_call.1} parent=1 // pred_check_branch
      %42 = sbr.rel (0) target = $region13
    $region12: #{tpu_custom_call.1} parent=1 // pred_region
      _
    $region13: #{tpu_custom_call.1} parent=1 // pred_fallthru
      _
    // Predicated region
    $region14: #{tpu_custom_call.1} parent=1 // pred_check
      _
    $region15: #{tpu_custom_call.1} parent=1 // pred_check_branch
      %44 = sbr.rel (0) target = $region17
    $region16: #{tpu_custom_call.1} parent=1 // pred_region
      %s46 = ssub.s32 512, 512
      %47 = vsyncadd [#allocation6], %s46
      %s48 = sshll.u32 [#allocation7], 4
      %s49 = int_to_ptr.vmem [resolvable:$true] %s48
      %54 = dma.hbm_to_vmem [thread:$0]  %s3, 512, %s49, [#allocation6], 128, 128, 8
    $region17: #{tpu_custom_call.1} parent=1 // pred_fallthru
      _
    // Predicated region
    $region18: #{tpu_custom_call.1} parent=1 // pred_check
      _
    $region19: #{tpu_custom_call.1} parent=1 // pred_check_branch
      %56 = sbr.rel (0) target = $region21
    $region20: #{tpu_custom_call.1} parent=1 // pred_region
      _
    $region21: #{tpu_custom_call.1} parent=1 // pred_fallthru
      _
    // Predicated region
    $region22: #{tpu_custom_call.1} parent=1 // pred_check
      _
    $region23: #{tpu_custom_call.1} parent=1 // pred_check_branch
      %58 = sbr.rel (0) target = $region25
    $region24: #{tpu_custom_call.1} parent=1 // pred_region
      %s60 = ssub.s32 512, 512
      %61 = vsyncadd [#allocation9], %s60
      %s62 = sshll.u32 [#allocation8], 4
      %s63 = int_to_ptr.vmem [resolvable:$true] %s62
      %68 = dma.hbm_to_vmem [thread:$0]  %s5, 512, %s63, [#allocation9], 128, 128, 8
    $region25: #{tpu_custom_call.1} parent=1 // pred_fallthru
      _
    // Predicated region
    $region26: #{tpu_custom_call.1} parent=1 // pred_check
      _
    $region27: #{tpu_custom_call.1} parent=1 // pred_check_branch
      %70 = sbr.rel (0) target = $region29
    $region28: #{tpu_custom_call.1} parent=1 // pred_region
      _
    $region29: #{tpu_custom_call.1} parent=1 // pred_fallthru
      _
    // Predicated region
    $region30: #{tpu_custom_call.1} parent=1 // pred_check
      _
    $region31: #{tpu_custom_call.1} parent=1 // pred_check_branch
      %72 = sbr.rel (0) target = $region33
    $region32: #{tpu_custom_call.1} parent=1 // pred_region
      _
    $region33: #{tpu_custom_call.1} parent=1 // pred_fallthru
      _
    // Predicated region
    $region34: #{tpu_custom_call.1} parent=1 // pred_check
      _
    $region35: #{tpu_custom_call.1} parent=1 // pred_check_branch
      %74 = sbr.rel (0) target = $region37
    $region36: #{tpu_custom_call.1} parent=1 // pred_region
      %s76 = ssub.s32 512, 512
      %77 = vsyncadd [#allocation9], %s76
      %s78 = sshll.u32 [#allocation10], 4
      %s79 = int_to_ptr.vmem [resolvable:$true] %s78
      %84 = dma.hbm_to_vmem [thread:$0]  %s8, 512, %s79, [#allocation9], 128, 128, 8
    $region37: #{tpu_custom_call.1} parent=1 // pred_fallthru
      _
    // Predicated region
    $region38: #{tpu_custom_call.1} parent=1 // pred_check
      _
    $region39: #{tpu_custom_call.1} parent=1 // pred_check_branch
      %86 = sbr.rel (0) target = $region41
    $region40: #{tpu_custom_call.1} parent=1 // pred_region
      _
    $region41: #{tpu_custom_call.1} parent=1 // pred_fallthru
      _
    // Predicated region
    $region42: #{tpu_custom_call.1} parent=1 // pred_check
      _
    $region43: #{tpu_custom_call.1} parent=1 // pred_check_branch
      %88 = sbr.rel (0) target = $region45
    $region44: #{tpu_custom_call.1} parent=1 // pred_region
      %89 = dma.done [#allocation3], 64
    $region45: #{tpu_custom_call.1} parent=1 // pred_fallthru
      _
    // Predicated region
    $region46: #{tpu_custom_call.1} parent=1 // pred_check
      _
    $region47: #{tpu_custom_call.1} parent=1 // pred_check_branch
      %91 = sbr.rel (0) target = $region49
    $region48: #{tpu_custom_call.1} parent=1 // pred_region
      %92 = dma.done [#allocation6], 256
    $region49: #{tpu_custom_call.1} parent=1 // pred_fallthru
      _
    // Predicated region
    $region50: #{tpu_custom_call.1} parent=1 // pred_check
      _
    $region51: #{tpu_custom_call.1} parent=1 // pred_check_branch
      %94 = sbr.rel (0) target = $region53
    $region52: #{tpu_custom_call.1} parent=1 // pred_region
      %95 = dma.done [#allocation6], 512
    $region53: #{tpu_custom_call.1} parent=1 // pred_fallthru
      _
    // Predicated region
    $region54: #{tpu_custom_call.1} parent=1 // pred_check
      _
    $region55: #{tpu_custom_call.1} parent=1 // pred_check_branch
      %97 = sbr.rel (0) target = $region57
    $region56: #{tpu_custom_call.1} parent=1 // pred_region
      %98 = dma.done [#allocation9], 512
    $region57: #{tpu_custom_call.1} parent=1 // pred_fallthru
      _
    // Predicated region
    $region58: #{tpu_custom_call.1} parent=1 // pred_check
      _
    $region59: #{tpu_custom_call.1} parent=1 // pred_check_branch
      %100 = sbr.rel (0) target = $region61
    $region60: #{tpu_custom_call.1} parent=1 // pred_region
      %101 = dma.done [#allocation9], 512
    $region61: #{tpu_custom_call.1} parent=1 // pred_fallthru
      _
    %v102 = vld [vmem:[#allocation2] sm:$0xf]
    %v103 = vld [vmem:[#allocation5] sm:$0xff]
    %v104 = vld [vmem:[#allocation5 + $0x8] sm:$0xff]
    %v105 = vld [vmem:[%s2] sm:$0x1]
    %v107 = vlaneseq
    %v108 = vshrl.u32 %v107, 7
    %v109 = vsub.s32 0, %v108
    %v110 = vrot.slane %v105, %v109
    %vm112 = vcmask 130048
    %v114 = vsel %vm112, %v102, 0
    %116 = vmatprep.subr.mxu0 0.0
    %117 = vmatpush1.msra.mxu0 %v103
    %118 = vmatprep.subr.mxu0 0.0
    %119 = vmatpush1.msra.mxu0 %v104
    %120 = vmatprep.subr.mxu0 0.0
    %121 = vmatpush1.msra.mxu0 0.0
    %122 = vmatprep.subr.mxu0 0.0
    %123 = vmatpush1.msra.mxu0 0.0
    %124 = vmatprep.subr.mxu0 0.0
    %125 = vmatpush1.msra.mxu0 0.0
    %126 = vmatprep.subr.mxu0 0.0
    %127 = vmatpush1.msra.mxu0 0.0
    %128 = vmatprep.subr.mxu0 0.0
    %129 = vmatpush1.msra.mxu0 0.0
    %130 = vmatprep.subr.mxu0 0.0
    %131 = vmatpush1.msra.mxu0 0.0
    %132 = vmatprep.subr.mxu0 0.0
    %133 = vmatpush1.msra.mxu0 0.0
    %134 = vmatprep.subr.mxu0 0.0
    %135 = vmatpush1.msra.mxu0 0.0
    %136 = vmatprep.subr.mxu0 0.0
    %137 = vmatpush1.msra.mxu0 0.0
    %138 = vmatprep.subr.mxu0 0.0
    %139 = vmatpush1.msra.mxu0 0.0
    %140 = vmatprep.subr.mxu0 0.0
    %141 = vmatpush1.msra.mxu0 0.0
    %142 = vmatprep.subr.mxu0 0.0
    %143 = vmatpush1.msra.mxu0 0.0
    %144 = vmatprep.subr.mxu0 0.0
    %145 = vmatpush1.msra.mxu0 0.0
    %146 = vmatprep.subr.mxu0 0.0
    %147 = vmatpush1.msra.mxu0 0.0
    %148 = vmatprep.subr.mxu0 0.0
    %149 = vmatpush1.msra.mxu0 0.0
    %150 = vmatprep.subr.mxu0 0.0
    %151 = vmatpush1.msra.mxu0 0.0
    %152 = vmatprep.subr.mxu0 0.0
    %153 = vmatpush1.msra.mxu0 0.0
    %154 = vmatprep.subr.mxu0 0.0
    %155 = vmatpush1.msra.mxu0 0.0
    %156 = vmatprep.subr.mxu0 0.0
    %157 = vmatpush1.msra.mxu0 0.0
    %158 = vmatprep.subr.mxu0 0.0
    %159 = vmatpush1.msra.mxu0 0.0
    %160 = vmatprep.subr.mxu0 0.0
    %161 = vmatpush1.msra.mxu0 0.0
    %162 = vmatprep.subr.mxu0 0.0
    %163 = vmatpush1.msra.mxu0 0.0
    %164 = vmatprep.subr.mxu0 0.0
    %165 = vmatpush1.msra.mxu0 0.0
    %166 = vmatprep.subr.mxu0 0.0
    %167 = vmatpush1.msra.mxu0 0.0
    %168 = vmatprep.subr.mxu0 0.0
    %169 = vmatpush1.msra.mxu0 0.0
    %170 = vmatprep.subr.mxu0 0.0
    %171 = vmatpush1.msra.mxu0 0.0
    %172 = vmatprep.subr.mxu0 0.0
    %173 = vmatpush1.msra.mxu0 0.0
    %174 = vmatprep.subr.mxu0 0.0
    %175 = vmatpush1.msra.mxu0 0.0
    %176 = vmatprep.subr.mxu0 0.0
    %177 = vmatpush1.msra.mxu0 0.0
    %178 = vmatprep.subr.mxu0 0.0
    %179 = vmatpush1.msra.mxu0 0.0
    %180 = vmatprep.mubr.f32.mxu0 0.0
    %181 = vmatmul.mubr.f32.gmra.mrb[0].mxu0 %v114
    %v182 = vpop.f32.mrb[0].mxu0
    %v183 = vadd.f32 %v110, %v182
    %v184 = vpop.f32.mrb[0].mxu0
    %185 = vdwg.mxu0
    %v186 = vld [vmem:[#allocation7] sm:$0xff]
    %v187 = vld [vmem:[#allocation7 + $0x8] sm:$0xff]
    %v188 = vld [vmem:[#allocation7 + $0x10] sm:$0xff]
    %v189 = vld [vmem:[#allocation7 + $0x18] sm:$0xff]
    %v190 = vld [vmem:[%s4] sm:$0x1]
    %v192 = vlaneseq
    %v193 = vshrl.u32 %v192, 7
    %v194 = vsub.s32 0, %v193
    %v195 = vrot.slane %v190, %v194
    %vm197 = vcmask 261120
    %v199 = vsel %vm197, %v183, 0
    %201 = vmatprep.subr.mxu0 0.0
    %202 = vmatpush1.msra.mxu0 %v186
    %203 = vmatprep.subr.mxu0 0.0
    %204 = vmatpush1.msra.mxu0 %v187
    %205 = vmatprep.subr.mxu0 0.0
    %206 = vmatpush1.msra.mxu0 %v188
    %207 = vmatprep.subr.mxu0 0.0
    %208 = vmatpush1.msra.mxu0 %v189
    %209 = vmatprep.subr.mxu0 0.0
    %210 = vmatpush1.msra.mxu0 0.0
    %211 = vmatprep.subr.mxu0 0.0
    %212 = vmatpush1.msra.mxu0 0.0
    %213 = vmatprep.subr.mxu0 0.0
    %214 = vmatpush1.msra.mxu0 0.0
    %215 = vmatprep.subr.mxu0 0.0
    %216 = vmatpush1.msra.mxu0 0.0
    %217 = vmatprep.subr.mxu0 0.0
    %218 = vmatpush1.msra.mxu0 0.0
    %219 = vmatprep.subr.mxu0 0.0
    %220 = vmatpush1.msra.mxu0 0.0
    %221 = vmatprep.subr.mxu0 0.0
    %222 = vmatpush1.msra.mxu0 0.0
    %223 = vmatprep.subr.mxu0 0.0
    %224 = vmatpush1.msra.mxu0 0.0
    %225 = vmatprep.subr.mxu0 0.0
    %226 = vmatpush1.msra.mxu0 0.0
    %227 = vmatprep.subr.mxu0 0.0
    %228 = vmatpush1.msra.mxu0 0.0
    %229 = vmatprep.subr.mxu0 0.0
    %230 = vmatpush1.msra.mxu0 0.0
    %231 = vmatprep.subr.mxu0 0.0
    %232 = vmatpush1.msra.mxu0 0.0
    %233 = vmatprep.subr.mxu0 0.0
    %234 = vmatpush1.msra.mxu0 0.0
    %235 = vmatprep.subr.mxu0 0.0
    %236 = vmatpush1.msra.mxu0 0.0
    %237 = vmatprep.subr.mxu0 0.0
    %238 = vmatpush1.msra.mxu0 0.0
    %239 = vmatprep.subr.mxu0 0.0
    %240 = vmatpush1.msra.mxu0 0.0
    %241 = vmatprep.subr.mxu0 0.0
    %242 = vmatpush1.msra.mxu0 0.0
    %243 = vmatprep.subr.mxu0 0.0
    %244 = vmatpush1.msra.mxu0 0.0
    %245 = vmatprep.subr.mxu0 0.0
    %246 = vmatpush1.msra.mxu0 0.0
    %247 = vmatprep.subr.mxu0 0.0
    %248 = vmatpush1.msra.mxu0 0.0
    %249 = vmatprep.subr.mxu0 0.0
    %250 = vmatpush1.msra.mxu0 0.0
    %251 = vmatprep.subr.mxu0 0.0
    %252 = vmatpush1.msra.mxu0 0.0
    %253 = vmatprep.subr.mxu0 0.0
    %254 = vmatpush1.msra.mxu0 0.0
    %255 = vmatprep.subr.mxu0 0.0
    %256 = vmatpush1.msra.mxu0 0.0
    %257 = vmatprep.subr.mxu0 0.0
    %258 = vmatpush1.msra.mxu0 0.0
    %259 = vmatprep.subr.mxu0 0.0
    %260 = vmatpush1.msra.mxu0 0.0
    %261 = vmatprep.subr.mxu0 0.0
    %262 = vmatpush1.msra.mxu0 0.0
    %263 = vmatprep.subr.mxu0 0.0
    %264 = vmatpush1.msra.mxu0 0.0
    %265 = vmatprep.mubr.f32.mxu0 0.0
    %266 = vmatmul.mubr.f32.gmra.mrb[0].mxu0 %v199
    %v267 = vpop.f32.mrb[0].mxu0
    %v268 = vadd.f32 %v195, %v267
    %v269 = vpop.f32.mrb[0].mxu0
    %270 = vdwg.mxu0
    %v271 = vld [vmem:[#allocation8] sm:$0xff]
    %v272 = vld [vmem:[#allocation8 + $0x8] sm:$0xff]
    %v273 = vld [vmem:[#allocation8 + $0x10] sm:$0xff]
    %v274 = vld [vmem:[#allocation8 + $0x18] sm:$0xff]
    %v275 = vld [vmem:[%s6] sm:$0x1]
    %v277 = vlaneseq
    %v278 = vshrl.u32 %v277, 7
    %v279 = vsub.s32 0, %v278
    %v280 = vrot.slane %v275, %v279
    %v282 = vld [vmem:[%s7] sm:$0x1]
    %v284 = vlaneseq
    %v285 = vshrl.u32 %v284, 7
    %v286 = vsub.s32 0, %v285
    %v287 = vrot.slane %v282, %v286
    %v288 = vsel %vm197, %v287, 0
    %290 = vmatprep.subr.mxu0 0.0
    %291 = vmatpush1.msra.mxu0 %v271
    %292 = vmatprep.subr.mxu0 0.0
    %293 = vmatpush1.msra.mxu0 %v272
    %294 = vmatprep.subr.mxu0 0.0
    %295 = vmatpush1.msra.mxu0 %v273
    %296 = vmatprep.subr.mxu0 0.0
    %297 = vmatpush1.msra.mxu0 %v274
    %298 = vmatprep.subr.mxu0 0.0
    %299 = vmatpush1.msra.mxu0 0.0
    %300 = vmatprep.subr.mxu0 0.0
    %301 = vmatpush1.msra.mxu0 0.0
    %302 = vmatprep.subr.mxu0 0.0
    %303 = vmatpush1.msra.mxu0 0.0
    %304 = vmatprep.subr.mxu0 0.0
    %305 = vmatpush1.msra.mxu0 0.0
    %306 = vmatprep.subr.mxu0 0.0
    %307 = vmatpush1.msra.mxu0 0.0
    %308 = vmatprep.subr.mxu0 0.0
    %309 = vmatpush1.msra.mxu0 0.0
    %310 = vmatprep.subr.mxu0 0.0
    %311 = vmatpush1.msra.mxu0 0.0
    %312 = vmatprep.subr.mxu0 0.0
    %313 = vmatpush1.msra.mxu0 0.0
    %314 = vmatprep.subr.mxu0 0.0
    %315 = vmatpush1.msra.mxu0 0.0
    %316 = vmatprep.subr.mxu0 0.0
    %317 = vmatpush1.msra.mxu0 0.0
    %318 = vmatprep.subr.mxu0 0.0
    %319 = vmatpush1.msra.mxu0 0.0
    %320 = vmatprep.subr.mxu0 0.0
    %321 = vmatpush1.msra.mxu0 0.0
    %322 = vmatprep.subr.mxu0 0.0
    %323 = vmatpush1.msra.mxu0 0.0
    %324 = vmatprep.subr.mxu0 0.0
    %325 = vmatpush1.msra.mxu0 0.0
    %326 = vmatprep.subr.mxu0 0.0
    %327 = vmatpush1.msra.mxu0 0.0
    %328 = vmatprep.subr.mxu0 0.0
    %329 = vmatpush1.msra.mxu0 0.0
    %330 = vmatprep.subr.mxu0 0.0
    %331 = vmatpush1.msra.mxu0 0.0
    %332 = vmatprep.subr.mxu0 0.0
    %333 = vmatpush1.msra.mxu0 0.0
    %334 = vmatprep.subr.mxu0 0.0
    %335 = vmatpush1.msra.mxu0 0.0
    %336 = vmatprep.subr.mxu0 0.0
    %337 = vmatpush1.msra.mxu0 0.0
    %338 = vmatprep.subr.mxu0 0.0
    %339 = vmatpush1.msra.mxu0 0.0
    %340 = vmatprep.subr.mxu0 0.0
    %341 = vmatpush1.msra.mxu0 0.0
    %342 = vmatprep.subr.mxu0 0.0
    %343 = vmatpush1.msra.mxu0 0.0
    %344 = vmatprep.subr.mxu0 0.0
    %345 = vmatpush1.msra.mxu0 0.0
    %346 = vmatprep.subr.mxu0 0.0
    %347 = vmatpush1.msra.mxu0 0.0
    %348 = vmatprep.subr.mxu0 0.0
    %349 = vmatpush1.msra.mxu0 0.0
    %350 = vmatprep.subr.mxu0 0.0
    %351 = vmatpush1.msra.mxu0 0.0
    %352 = vmatprep.subr.mxu0 0.0
    %353 = vmatpush1.msra.mxu0 0.0
    %354 = vmatprep.mubr.f32.mxu0 0.0
    %355 = vmatmul.mubr.f32.gmra.mrb[0].mxu0 %v288
    %v356 = vpop.f32.mrb[0].mxu0
    %v357 = vadd.f32 %v280, %v356
    %v358 = vpop.f32.mrb[0].mxu0
    %359 = vdwg.mxu0
    %v360 = vadd.f32 %v268, %v357
    %v361 = vxor.u32 %v360, 2147483648
    %v362 = vmul.f32 %v361, 1.442695
    %v363 = vpow.pop %v362
    %v364 = vadd.f32 %v363, 1.0
    %v365 = vrcp.pop %v364
    %v366 = vmul.f32 1.0, %v365
    %368 = vrot.lane.b32.xlu0 %v357, 64
    %v369 = vpop.permute.xlu0 %368
    %v371 = vmul.f32 %v366, %v369
    %373 = vrot.lane.b32.xlu0 %v371, 64
    %v374 = vpop.permute.xlu0 %373
    %v376 = vadd.f32 %v268, %v374
    %v377 = vtanh.pop %v376
    %v378 = vsub.f32 1.0, %v366
    %380 = vrot.lane.b32.xlu0 %v377, 96
    %v381 = vpop.permute.xlu0 %380
    %v383 = vmul.f32 %v378, %v381
    %384 = vrot.lane.b32.xlu0 %v287, 32
    %v385 = vpop.permute.xlu0 %384
    %v387 = vmul.f32 %v366, %v385
    %v388 = vadd.f32 %v383, %v387
    %390 = vrot.lane.b32.xlu0 %v388, 96
    %v391 = vpop.permute.xlu0 %390
    %v392 = vsel %vm197, %v391, 0
    %394 = vmatprep.subr.mxu0 0.0
    %395 = vmatpush1.msra.mxu0 %v271
    %396 = vmatprep.subr.mxu0 0.0
    %397 = vmatpush1.msra.mxu0 %v272
    %398 = vmatprep.subr.mxu0 0.0
    %399 = vmatpush1.msra.mxu0 %v273
    %400 = vmatprep.subr.mxu0 0.0
    %401 = vmatpush1.msra.mxu0 %v274
    %402 = vmatprep.subr.mxu0 0.0
    %403 = vmatpush1.msra.mxu0 0.0
    %404 = vmatprep.subr.mxu0 0.0
    %405 = vmatpush1.msra.mxu0 0.0
    %406 = vmatprep.subr.mxu0 0.0
    %407 = vmatpush1.msra.mxu0 0.0
    %408 = vmatprep.subr.mxu0 0.0
    %409 = vmatpush1.msra.mxu0 0.0
    %410 = vmatprep.subr.mxu0 0.0
    %411 = vmatpush1.msra.mxu0 0.0
    %412 = vmatprep.subr.mxu0 0.0
    %413 = vmatpush1.msra.mxu0 0.0
    %414 = vmatprep.subr.mxu0 0.0
    %415 = vmatpush1.msra.mxu0 0.0
    %416 = vmatprep.subr.mxu0 0.0
    %417 = vmatpush1.msra.mxu0 0.0
    %418 = vmatprep.subr.mxu0 0.0
    %419 = vmatpush1.msra.mxu0 0.0
    %420 = vmatprep.subr.mxu0 0.0
    %421 = vmatpush1.msra.mxu0 0.0
    %422 = vmatprep.subr.mxu0 0.0
    %423 = vmatpush1.msra.mxu0 0.0
    %424 = vmatprep.subr.mxu0 0.0
    %425 = vmatpush1.msra.mxu0 0.0
    %426 = vmatprep.subr.mxu0 0.0
    %427 = vmatpush1.msra.mxu0 0.0
    %428 = vmatprep.subr.mxu0 0.0
    %429 = vmatpush1.msra.mxu0 0.0
    %430 = vmatprep.subr.mxu0 0.0
    %431 = vmatpush1.msra.mxu0 0.0
    %432 = vmatprep.subr.mxu0 0.0
    %433 = vmatpush1.msra.mxu0 0.0
    %434 = vmatprep.subr.mxu0 0.0
    %435 = vmatpush1.msra.mxu0 0.0
    %436 = vmatprep.subr.mxu0 0.0
    %437 = vmatpush1.msra.mxu0 0.0
    %438 = vmatprep.subr.mxu0 0.0
    %439 = vmatpush1.msra.mxu0 0.0
    %440 = vmatprep.subr.mxu0 0.0
    %441 = vmatpush1.msra.mxu0 0.0
    %442 = vmatprep.subr.mxu0 0.0
    %443 = vmatpush1.msra.mxu0 0.0
    %444 = vmatprep.subr.mxu0 0.0
    %445 = vmatpush1.msra.mxu0 0.0
    %446 = vmatprep.subr.mxu0 0.0
    %447 = vmatpush1.msra.mxu0 0.0
    %448 = vmatprep.subr.mxu0 0.0
    %449 = vmatpush1.msra.mxu0 0.0
    %450 = vmatprep.subr.mxu0 0.0
    %451 = vmatpush1.msra.mxu0 0.0
    %452 = vmatprep.subr.mxu0 0.0
    %453 = vmatpush1.msra.mxu0 0.0
    %454 = vmatprep.subr.mxu0 0.0
    %455 = vmatpush1.msra.mxu0 0.0
    %456 = vmatprep.subr.mxu0 0.0
    %457 = vmatpush1.msra.mxu0 0.0
    %458 = vmatprep.mubr.f32.mxu0 0.0
    %459 = vmatmul.mubr.f32.gmra.mrb[0].mxu0 %v392
    %v460 = vpop.f32.mrb[0].mxu0
    %v461 = vadd.f32 %v280, %v460
    %v462 = vpop.f32.mrb[0].mxu0
    %463 = vdwg.mxu0
    %v465 = vrot.slane %v461, 6
    %v467 = vadd.f32 %v268, %v465
    %v468 = vxor.u32 %v467, 2147483648
    %v469 = vmul.f32 %v468, 1.442695
    %v470 = vpow.pop %v469
    %v471 = vadd.f32 %v470, 1.0
    %v472 = vrcp.pop %v471
    %v473 = vmul.f32 1.0, %v472
    %474 = vrot.lane.b32.xlu0 %v465, 64
    %v475 = vpop.permute.xlu0 %474
    %v477 = vmul.f32 %v473, %v475
    %479 = vrot.lane.b32.xlu0 %v477, 64
    %v480 = vpop.permute.xlu0 %479
    %v482 = vadd.f32 %v268, %v480
    %v483 = vtanh.pop %v482
    %v484 = vsub.f32 1.0, %v473
    %486 = vrot.lane.b32.xlu0 %v483, 96
    %v487 = vpop.permute.xlu0 %486
    %v489 = vmul.f32 %v484, %v487
    %v490 = vrot.slane %v388, 6
    %v492 = vmul.f32 %v473, %v490
    %v493 = vadd.f32 %v489, %v492
    %vm494 = vcmask 1041408
    %v495 = vsel %vm494, %v388, %v493
    %v496 = vld [vmem:[#allocation10] sm:$0xff]
    %v497 = vld [vmem:[#allocation10 + $0x8] sm:$0xff]
    %v498 = vld [vmem:[#allocation10 + $0x10] sm:$0xff]
    %v499 = vld [vmem:[#allocation10 + $0x18] sm:$0xff]
    %v500 = vld [vmem:[%s9] sm:$0x1]
    %v502 = vlaneseq
    %v503 = vshrl.u32 %v502, 7
    %v504 = vsub.s32 0, %v503
    %v505 = vrot.slane %v500, %v504
    %508 = vrot.lane.b32.xlu0 %v495, 96
    %v509 = vpop.permute.xlu0 %508
    %v510 = vsel %vm197, %v509, 0
    %512 = vmatprep.subr.mxu0 0.0
    %513 = vmatpush1.msra.mxu0 %v496
    %514 = vmatprep.subr.mxu0 0.0
    %515 = vmatpush1.msra.mxu0 %v497
    %516 = vmatprep.subr.mxu0 0.0
    %517 = vmatpush1.msra.mxu0 %v498
    %518 = vmatprep.subr.mxu0 0.0
    %519 = vmatpush1.msra.mxu0 %v499
    %520 = vmatprep.subr.mxu0 0.0
    %521 = vmatpush1.msra.mxu0 0.0
    %522 = vmatprep.subr.mxu0 0.0
    %523 = vmatpush1.msra.mxu0 0.0
    %524 = vmatprep.subr.mxu0 0.0
    %525 = vmatpush1.msra.mxu0 0.0
    %526 = vmatprep.subr.mxu0 0.0
    %527 = vmatpush1.msra.mxu0 0.0
    %528 = vmatprep.subr.mxu0 0.0
    %529 = vmatpush1.msra.mxu0 0.0
    %530 = vmatprep.subr.mxu0 0.0
    %531 = vmatpush1.msra.mxu0 0.0
    %532 = vmatprep.subr.mxu0 0.0
    %533 = vmatpush1.msra.mxu0 0.0
    %534 = vmatprep.subr.mxu0 0.0
    %535 = vmatpush1.msra.mxu0 0.0
    %536 = vmatprep.subr.mxu0 0.0
    %537 = vmatpush1.msra.mxu0 0.0
    %538 = vmatprep.subr.mxu0 0.0
    %539 = vmatpush1.msra.mxu0 0.0
    %540 = vmatprep.subr.mxu0 0.0
    %541 = vmatpush1.msra.mxu0 0.0
    %542 = vmatprep.subr.mxu0 0.0
    %543 = vmatpush1.msra.mxu0 0.0
    %544 = vmatprep.subr.mxu0 0.0
    %545 = vmatpush1.msra.mxu0 0.0
    %546 = vmatprep.subr.mxu0 0.0
    %547 = vmatpush1.msra.mxu0 0.0
    %548 = vmatprep.subr.mxu0 0.0
    %549 = vmatpush1.msra.mxu0 0.0
    %550 = vmatprep.subr.mxu0 0.0
    %551 = vmatpush1.msra.mxu0 0.0
    %552 = vmatprep.subr.mxu0 0.0
    %553 = vmatpush1.msra.mxu0 0.0
    %554 = vmatprep.subr.mxu0 0.0
    %555 = vmatpush1.msra.mxu0 0.0
    %556 = vmatprep.subr.mxu0 0.0
    %557 = vmatpush1.msra.mxu0 0.0
    %558 = vmatprep.subr.mxu0 0.0
    %559 = vmatpush1.msra.mxu0 0.0
    %560 = vmatprep.subr.mxu0 0.0
    %561 = vmatpush1.msra.mxu0 0.0
    %562 = vmatprep.subr.mxu0 0.0
    %563 = vmatpush1.msra.mxu0 0.0
    %564 = vmatprep.subr.mxu0 0.0
    %565 = vmatpush1.msra.mxu0 0.0
    %566 = vmatprep.subr.mxu0 0.0
    %567 = vmatpush1.msra.mxu0 0.0
    %568 = vmatprep.subr.mxu0 0.0
    %569 = vmatpush1.msra.mxu0 0.0
    %570 = vmatprep.subr.mxu0 0.0
    %571 = vmatpush1.msra.mxu0 0.0
    %572 = vmatprep.subr.mxu0 0.0
    %573 = vmatpush1.msra.mxu0 0.0
    %574 = vmatprep.subr.mxu0 0.0
    %575 = vmatpush1.msra.mxu0 0.0
    %576 = vmatprep.mubr.f32.mxu0 0.0
    %577 = vmatmul.mubr.f32.gmra.mrb[0].mxu0 %v510
    %v578 = vpop.f32.mrb[0].mxu0
    %v579 = vadd.f32 %v505, %v578
    %v580 = vpop.f32.mrb[0].mxu0
    %581 = vdwg.mxu0
    %582 = vst [vmem:[#allocation11] sm:$0xf] %v579
    // Predicated region
    $region62: #{tpu_custom_call.1} parent=1 // pred_check
      _
    $region63: #{tpu_custom_call.1} parent=1 // pred_check_branch
      %584 = sbr.rel (0) target = $region65
    $region64: #{tpu_custom_call.1} parent=1 // pred_region
      %s586 = ssub.s32 64, 64
      %587 = vsyncadd [#allocation4], %s586
      %s589 = sshll.u32 [#allocation11], 4
      %s590 = int_to_ptr.vmem [resolvable:$true] %s589
      %592 = dma.vmem_to_hbm [thread:$0]  %s590, 64, %s10, [#allocation4]
    $region65: #{tpu_custom_call.1} parent=1 // pred_fallthru
      _
    // Predicated region
    $region66: #{tpu_custom_call.1} parent=1 // pred_check
      _
    $region67: #{tpu_custom_call.1} parent=1 // pred_check_branch
      %594 = sbr.rel (0) target = $region69
    $region68: #{tpu_custom_call.1} parent=1 // pred_region
      %595 = dma.done [#allocation4], 64
    $region69: #{tpu_custom_call.1} parent=1 // pred_fallthru
      _
    %596 = vsyncpa [#allocation3], 1
    %597 = vsyncpa [#allocation6], 1
    %598 = vsyncpa [#allocation9], 1
    %599 = vsyncpa [#allocation4], 1

</llo_original>
